<compile_context>
chip_gen: v7x
topology: tpu7x:2x2x1
jax: 0.10.0
libtpu: 0.0.40
codegen_flags: <defaults>
</compile_context>

<pallas_src>
import jax
import jax.numpy as jnp
from jax.experimental import pallas as pl
from jax.experimental.pallas import tpu as pltpu


def _cdiv(a, b):
    return (a + b - 1) // b


def _round_up(a, b):
    return _cdiv(a, b) * b


def _vmem_capacity_bytes():
    """Physical VMEM per TensorCore; conservative fallback if query fails."""
    try:
        return int(pltpu.get_tpu_info().vmem_capacity_bytes)
    except Exception:
        return 64 * 1024 * 1024  # v7x-safe default


# ---------------------------------------------------------------------------
# Kernels
# ---------------------------------------------------------------------------

def _single_step_kernel(norm_ref, mbox_ref, out_ref):
    """Whole mailbox axis in one block: sum over D, then scale by norm.

    norm_ref: (tn, F), mbox_ref: (tn, D, F), out_ref: (tn, F)
    """
    s = jnp.sum(mbox_ref[...].astype(jnp.float32), axis=1)
    out_ref[...] = (s * norm_ref[...].astype(jnp.float32)).astype(out_ref.dtype)


def _make_tiled_kernel(td, D, F):
    """D tiled onto the grid as a reduction axis. td is a multiple of 8."""
    groups = td // 8
    needs_mask = (D % td) != 0

    def kernel(norm_ref, mbox_ref, out_ref, acc_ref):
        d = pl.program_id(1)

        @pl.when(d == 0)
        def _init():
            acc_ref[...] = jnp.zeros_like(acc_ref)

        chunk = mbox_ref[...].astype(jnp.float32)            # (tn, td, F)
        if needs_mask:
            # The last D chunk reads past the mailbox array; out-of-bounds
            # values are unspecified, so select (not multiply) them to zero.
            local = jax.lax.broadcasted_iota(jnp.int32, (td, F), 0)
            mask = (local + d * td) < D                       # (td, F)
            chunk = jnp.where(mask[None, :, :], chunk, 0.0)

        tn = chunk.shape[0]
        # Deferred sublane reduction: accumulate 8 partial rows per node with
        # pure VPU vreg adds; single 8->1 XLU reduce happens in the finalize.
        acc_ref[...] += chunk.reshape(tn, groups, 8, F).sum(axis=1)

        @pl.when(d == pl.num_programs(1) - 1)
        def _finalize():
            total = acc_ref[...].sum(axis=1)                  # (tn, F)
            out_ref[...] = (
                total * norm_ref[...].astype(jnp.float32)
            ).astype(out_ref.dtype)

    return kernel


# ---------------------------------------------------------------------------
# Tiling
# ---------------------------------------------------------------------------

def _choose_tiles(N, D, F, in_itemsize, out_itemsize, align, budget_bytes):
    """Pick (tn, td) so the full double-buffered working set fits the budget.

    Per node-row VMEM bytes (F rounded to a lane-dense 128 for accounting):
      mailbox stream : 2 * td * in_itemsize   (double-buffered)
      norm tile      : 2 * in_itemsize
      out tile       : 2 * out_itemsize
      f32 acc scratch: 8 * 4  (reserved even when unused -> slack, never OOM)
    """
    F_lane = _round_up(max(F, 1), 128)
    fixed = 2 * in_itemsize + 2 * out_itemsize + 8 * 4

    def tn_for(td):
        per_row = F_lane * (2 * td * in_itemsize + fixed)
        tn = budget_bytes // max(per_row, 1)
        tn = (tn // align) * align
        return max(align, min(4096, tn))

    tn_needed = min(4096, _round_up(N, align))
    tn_goal = max(align, min(512, tn_needed))

    td = D                      # full mailbox axis: no reduction grid axis
    tn = tn_for(td)
    if tn < tn_goal and D > align:
        # High-degree bucket: shrink td (the reduction axis) before tn so the
        # node tile stays large; td stays a multiple of `align` (>= 8).
        td = align
        while td * 2 <= D and tn_for(td * 2) >= tn_goal:
            td *= 2
        tn = tn_for(td)
    tn = min(tn, tn_needed)
    return tn, td


# ---------------------------------------------------------------------------
# Wrapper
# ---------------------------------------------------------------------------

def gcn_reduce(self_norm, mailbox_norm, *, vmem_budget_bytes=None):
    """self_norm: (N, F), mailbox_norm: (N, D, F) -> accum (N, F)."""
    N, F = self_norm.shape
    N2, D, F2 = mailbox_norm.shape
    assert N2 == N and F2 == F

    in_itemsize = jnp.dtype(mailbox_norm.dtype).itemsize
    out_dtype = self_norm.dtype
    out_itemsize = jnp.dtype(out_dtype).itemsize
    # Sublane alignment for blocked (non-full) dims: 8 rows f32, 16 rows bf16.
    align = 8 * max(1, 4 // in_itemsize)

    vmem_cap = _vmem_capacity_bytes()
    # ~48 MiB scoped limit on 64 MiB parts (v7x), ~96 MiB on 128 MiB parts.
    vmem_limit = min(100 * 1024 * 1024, (vmem_cap * 3) // 4)
    if vmem_budget_bytes is None:
        vmem_budget_bytes = (vmem_limit * 7) // 10

    tn, td = _choose_tiles(N, D, F, in_itemsize, out_itemsize, align,
                           vmem_budget_bytes)

    # Keep >= 2 node-grid steps only on dual-TensorCore (small-VMEM) parts so
    # both cores get work; no pointless extra step on single-TC v5e/v6e.
    two_tensorcores = vmem_cap <= 64 * 1024 * 1024
    if two_tensorcores and N > align and _cdiv(N, tn) < 2:
        tn = _round_up(_cdiv(N, 2), align)

    n_steps = _cdiv(N, tn)
    d_steps = _cdiv(D, td)

    cost = pl.CostEstimate(
        flops=N * D * F + N * F,
        transcendentals=0,
        bytes_accessed=(N * D * F * in_itemsize
                        + N * F * in_itemsize
                        + N * F * out_itemsize),
    )

    if d_steps == 1:
        # Whole mailbox axis per node tile: no accumulator / scratch needed.
        grid_spec = pltpu.PrefetchScalarGridSpec(
            num_scalar_prefetch=0,
            grid=(n_steps,),
            in_specs=[
                pl.BlockSpec((tn, F), lambda i: (i, 0)),
                pl.BlockSpec((tn, D, F), lambda i: (i, 0, 0)),
            ],
            out_specs=pl.BlockSpec((tn, F), lambda i: (i, 0)),
        )
        kernel = _single_step_kernel
        dim_sem = ("parallel",)
    else:
        grid_spec = pltpu.PrefetchScalarGridSpec(
            num_scalar_prefetch=0,
            grid=(n_steps, d_steps),
            in_specs=[
                pl.BlockSpec((tn, F), lambda i, d: (i, 0)),
                pl.BlockSpec((tn, td, F), lambda i, d: (i, d, 0)),
            ],
            out_specs=pl.BlockSpec((tn, F), lambda i, d: (i, 0)),
            scratch_shapes=[pltpu.VMEM((tn, 8, F), jnp.float32)],
        )
        kernel = _make_tiled_kernel(td, D, F)
        dim_sem = ("parallel", "arbitrary")

    return pl.pallas_call(
        kernel,
        out_shape=jax.ShapeDtypeStruct((N, F), out_dtype),
        grid_spec=grid_spec,
        compiler_params=pltpu.CompilerParams(
            dimension_semantics=dim_sem,
            vmem_limit_bytes=vmem_limit,
        ),
        cost_estimate=cost,
    )(self_norm, mailbox_norm)


if __name__ == "__main__":
    keys = jax.random.split(jax.random.PRNGKey(0), 6)

    def ref_fn(norm, mbox):
        # Reference: mul-then-sum exactly like the PyTorch module, in f32.
        return jnp.sum(
            mbox.astype(jnp.float32) * norm.astype(jnp.float32)[:, None, :],
            axis=1,
        )

    # Case 1: f32, unaligned N/F, low degree -> single-D-step path.
    N, D, F = 18, 8, 96
    norm1 = jax.random.normal(keys[0], (N, F), dtype=jnp.float32)
    mbox1 = jax.random.normal(keys[1], (N, D, F), dtype=jnp.float32)
    out1 = jax.block_until_ready(gcn_reduce(norm1, mbox1))
    assert out1.shape == (N, F)
    assert jnp.allclose(out1, ref_fn(norm1, mbox1), atol=1e-5, rtol=1e-5)

    # Case 2: f32, tiny forced budget -> tiled-D reduction path with a masked
    # D tail (20 % 8 != 0) and multiple node-grid steps.
    N, D, F = 40, 20, 64
    norm2 = jax.random.normal(keys[2], (N, F), dtype=jnp.float32)
    mbox2 = jax.random.normal(keys[3], (N, D, F), dtype=jnp.float32)
    out2 = jax.block_until_ready(
        gcn_reduce(norm2, mbox2, vmem_budget_bytes=256 * 1024))
    assert out2.shape == (N, F)
    assert jnp.allclose(out2, ref_fn(norm2, mbox2), atol=1e-5, rtol=1e-5)

    # Case 3: bf16 inputs (f32 accumulation), tiled-D path with 16-row tiles.
    N, D, F = 24, 20, 128
    norm3 = jax.random.normal(keys[4], (N, F), dtype=jnp.bfloat16)
    mbox3 = jax.random.normal(keys[5], (N, D, F), dtype=jnp.bfloat16)
    out3 = jax.block_until_ready(
        gcn_reduce(norm3, mbox3, vmem_budget_bytes=256 * 1024))
    assert out3.shape == (N, F)
    assert jnp.allclose(out3.astype(jnp.float32), ref_fn(norm3, mbox3),
                        atol=5e-2, rtol=5e-2)

    # TODO(synk): custom `aggregator` callables (GATReduce.apply_agg hook) are
    # not translated; only the default aggregator=None -> sum(dim=1) path is.
    print("KERNEL_OK")
</pallas_src>

<mosaic_0001>
module attributes {stable_mosaic.version = 11 : i64} {
  func.func @_single_step_kernel(%arg0: i32, %arg1: memref<16x96xf32, #tpu.memory_space<vmem>>, %arg2: memref<16x8x96xf32, #tpu.memory_space<vmem>>, %arg3: memref<16x96xf32, #tpu.memory_space<vmem>>) attributes {dimension_semantics = [#tpu.dimension_semantics<parallel>], iteration_bounds = array<i64: 2>, scalar_prefetch = 0 : i64, scratch_operands = 0 : i64, tpu.core_type = #tpu.core_type<tc>, window_params = [{transform_indices = @transform_0, window_bounds = array<i64: 16, 96>}, {transform_indices = @transform_1, window_bounds = array<i64: 16, 8, 96>}, {transform_indices = @transform_2, window_bounds = array<i64: 16, 96>}]} {
    %c0 = arith.constant 0 : index
    %c0_0 = arith.constant 0 : index
    %c0_1 = arith.constant 0 : index
    %0 = vector.load %arg2[%c0, %c0_0, %c0_1] : memref<16x8x96xf32, #tpu.memory_space<vmem>>, vector<16x8x96xf32>
    %cst = arith.constant dense<0.000000e+00> : vector<16x96xf32>
    %1 = vector.multi_reduction <add>, %0, %cst [1] : vector<16x8x96xf32> to vector<16x96xf32>
    %c0_2 = arith.constant 0 : index
    %c0_3 = arith.constant 0 : index
    %2 = vector.load %arg1[%c0_2, %c0_3] : memref<16x96xf32, #tpu.memory_space<vmem>>, vector<16x96xf32>
    %3 = arith.mulf %1, %2 : vector<16x96xf32>
    %c0_4 = arith.constant 0 : index
    %c0_5 = arith.constant 0 : index
    %4 = vector.load %arg3[%c0_4, %c0_5] : memref<16x96xf32, #tpu.memory_space<vmem>>, vector<16x96xf32>
    tpu.vector_store %arg3[%c0_4, %c0_5], %3 {strides = array<i32>} : memref<16x96xf32, #tpu.memory_space<vmem>>, vector<16x96xf32>,
    return
  }
  func.func @transform_0(%arg0: i32) -> (i32, i32) {
    %c0_i32 = arith.constant 0 : i32
    %c0_i32_0 = arith.constant 0 : i32
    return %arg0, %c0_i32 : i32, i32
  }
  func.func @transform_1(%arg0: i32) -> (i32, i32, i32) {
    %c0_i32 = arith.constant 0 : i32
    %c0_i32_0 = arith.constant 0 : i32
    %c0_i32_1 = arith.constant 0 : i32
    return %arg0, %c0_i32, %c0_i32_0 : i32, i32, i32
  }
  func.func @transform_2(%arg0: i32) -> (i32, i32) {
    %c0_i32 = arith.constant 0 : i32
    %c0_i32_0 = arith.constant 0 : i32
    return %arg0, %c0_i32 : i32, i32
  }
}

</mosaic_0001>

<llo_original>
// kernel: tpu_custom_call.1
$region0: #{tpu_custom_call.1}
  #allocation0 [shape = 'u32[]', space=smem, size = 0x4, offset = 0x4, fixed_abs, tag = 'smem constant byte address 0x4 - core index']
  #allocation1 [shape = 'u32[144,128]{1,0:T(1,128)}', space=vmem, size = 0x12000, scoped, tag = 'internal scratch']
  %s0 = inlined_call_operand.hbm [shape: f32[18,96], index: 0, kind: input, shape index: {}]
  %s1 = inlined_call_operand.hbm [shape: f32[18,8,96], index: 1, kind: input, shape index: {}]
  %s2 = inlined_call_operand.hbm [shape: f32[18,96], index: 2, kind: output, shape index: {}]
  %s3 = sld [smem:[#allocation0]]
  $region49: #{tpu_custom_call.1} parent=0
    _
  %s5 = ssub.s32 1, %s3
  %s6 = scalar_select 0, %s5, %s3
  $region1: #{tpu_custom_call.1} parent=0
    #allocation2 [shape = 'u8[16384]{0}', space=vmem, size = 0x4000, scoped, tag = 'input window, operand 0']
    #allocation3 [shape = 's32[2]{0}', space=sflag, size = 0x8, scoped, tag = 'scoped memory for tpu_custom_call.1']
    #allocation4 [shape = 's32[2]{0}', space=sflag, size = 0x8, scoped, tag = 'scoped memory for tpu_custom_call.1']
    #allocation5 [shape = 'u8[131072]{0}', space=vmem, size = 0x20000, scoped, tag = 'input window, operand 1']
    #allocation6 [shape = 's32[2]{0}', space=sflag, size = 0x8, scoped, tag = 'scoped memory for tpu_custom_call.1']
    #allocation7 [shape = 'u8[16384]{0}', space=vmem, size = 0x4000, scoped, tag = 'output window, operand 0']
    %7 = vsyncpa [#allocation3], 0
    %s8 = scalar_lea.sflag [#allocation3], 1
    %9 = vsyncpa %s8, 0
    %10 = vsyncpa [#allocation6], 0
    %s11 = scalar_lea.sflag [#allocation6], 1
    %12 = vsyncpa %s11, 0
    %13 = vsyncpa [#allocation4], 0
    %s14 = scalar_lea.sflag [#allocation4], 1
    %15 = vsyncpa %s14, 0
    loop: start=0, step=1, limit=4
    $region2: #{tpu_custom_call.1} parent=1 // loop_pre_header
      _
    $region3: #{tpu_custom_call.1} parent=1 // loop_header
      %s17 = sphi 0, %s21
      %p18 = scmp.ge.s32.totalorder %s17, 4
      %s27 = sphi 0, %s29
      %s30 = sphi 0, %s27
      %s31 = sphi 0, %s30
      %s47 = sphi 0, %s31
      %s53 = sphi 0, %s55
      %s56 = sphi 0, %s53
      %s57 = sphi 0, %s56
      %s73 = sphi 0, %s57
      %s79 = sphi 0, %s81
      %s82 = sphi 0, %s79
      %s83 = sphi 0, %s82
      %s99 = sphi 0, %s83
    $region4: #{tpu_custom_call.1} parent=1 // loop_header_branch
      %20 = sbr.rel (%p18) target = $region8
    $region5: #{tpu_custom_call.1} parent=1 // loop_body
      %s22 = ssub.s32 %s17, 1
      %s23 = ssub.s32 %s17, 2
      %s24 = sadd.s32 %s17, 1
      %s25 = ssub.s32 %s17, %s24
      %p26 = scmp.eq.s32.totalorder %s25, 0
      %s28 = sadd.s32 %s27, 1
      %s29 = scalar_select %p26, %s27, %s28
      %p32 = pneg %p26
      %p33 = scmp.eq.s32.totalorder %s17, 1
      %p34 = por %p32, %p33
      %p35 = scmp.ne.s32.totalorder %s27, %s30
      %p36 = scmp.eq.s32.totalorder %s17, 0
      %p37 = por %p35, %p36
      %p38 = scmp.ne.s32.totalorder %s27, %s30
      %p39 = scmp.eq.s32.totalorder %s22, 1
      %p40 = por %p38, %p39
      %p41 = scmp.ne.s32.totalorder %s30, %s31
      %p42 = scmp.eq.s32.totalorder %s22, 0
      %p43 = por %p41, %p42
      %p44 = scmp.ne.s32.totalorder %s30, %s31
      %p45 = scmp.eq.s32.totalorder %s23, 1
      %p46 = por %p44, %p45
      %p48 = scmp.ne.s32.totalorder %s31, %s47
      %p49 = scmp.eq.s32.totalorder %s23, 0
      %p50 = por %p48, %p49
      %s51 = ssub.s32 %s17, %s24
      %p52 = scmp.eq.s32.totalorder %s51, 0
      %s54 = sadd.s32 %s53, 1
      %s55 = scalar_select %p52, %s53, %s54
      %p58 = pneg %p52
      %p59 = scmp.eq.s32.totalorder %s17, 1
      %p60 = por %p58, %p59
      %p61 = scmp.ne.s32.totalorder %s53, %s56
      %p62 = scmp.eq.s32.totalorder %s17, 0
      %p63 = por %p61, %p62
      %p64 = scmp.ne.s32.totalorder %s53, %s56
      %p65 = scmp.eq.s32.totalorder %s22, 1
      %p66 = por %p64, %p65
      %p67 = scmp.ne.s32.totalorder %s56, %s57
      %p68 = scmp.eq.s32.totalorder %s22, 0
      %p69 = por %p67, %p68
      %p70 = scmp.ne.s32.totalorder %s56, %s57
      %p71 = scmp.eq.s32.totalorder %s23, 1
      %p72 = por %p70, %p71
      %p74 = scmp.ne.s32.totalorder %s57, %s73
      %p75 = scmp.eq.s32.totalorder %s23, 0
      %p76 = por %p74, %p75
      %s77 = ssub.s32 %s17, %s24
      %p78 = scmp.eq.s32.totalorder %s77, 0
      %s80 = sadd.s32 %s79, 1
      %s81 = scalar_select %p78, %s79, %s80
      %p84 = pneg %p78
      %p85 = scmp.eq.s32.totalorder %s17, 1
      %p86 = por %p84, %p85
      %p87 = scmp.ne.s32.totalorder %s79, %s82
      %p88 = scmp.eq.s32.totalorder %s17, 0
      %p89 = por %p87, %p88
      %p90 = scmp.ne.s32.totalorder %s79, %s82
      %p91 = scmp.eq.s32.totalorder %s22, 1
      %p92 = por %p90, %p91
      %p93 = scmp.ne.s32.totalorder %s82, %s83
      %p94 = scmp.eq.s32.totalorder %s22, 0
      %p95 = por %p93, %p94
      %p96 = scmp.ne.s32.totalorder %s82, %s83
      %p97 = scmp.eq.s32.totalorder %s23, 1
      %p98 = por %p96, %p97
      %p100 = scmp.ne.s32.totalorder %s83, %s99
      %p101 = scmp.eq.s32.totalorder %s23, 0
      %p102 = por %p100, %p101
      %p103 = scmp.le.s32.totalorder 1, %s17
      %p104 = scmp.lt.s32.totalorder %s17, 3
      %p105 = pnand %p103, %p104
      %p106 = pneg %p105
      // Predicated region
      $region9: #{tpu_custom_call.1} parent=5 // pred_check
        _
      $region10: #{tpu_custom_call.1} parent=5 // pred_check_branch
        %108 = sbr.rel (%p105) target = $region12
      $region11: #{tpu_custom_call.1} parent=5 // pred_region
        %s109 = ssub.s32 %s17, 1
      $region12: #{tpu_custom_call.1} parent=5 // pred_fallthru
        _
      %p110 = scmp.lt.s32.totalorder %s17, 2
      // Predicated region
      $region13: #{tpu_custom_call.1} parent=5 // pred_check
        %p111 = pneg %p110
      $region14: #{tpu_custom_call.1} parent=5 // pred_check_branch
        %113 = sbr.rel (%p111) target = $region16
      $region15: #{tpu_custom_call.1} parent=5 // pred_region
        // Predicated region
        $region17: #{tpu_custom_call.1} parent=15 // pred_check
          %p114 = pneg %p37
        $region18: #{tpu_custom_call.1} parent=15 // pred_check_branch
          %116 = sbr.rel (%p114) target = $region20
        $region19: #{tpu_custom_call.1} parent=15 // pred_region
          %s117 = sand.u32 %s27, 1
          %s118 = scalar_lea.sflag [#allocation3], %s117
          %s119 = sand.u32 %s27, 1
          %s120 = smul.addr %s119, 16
          %s121 = scalar_lea.vmem [#allocation2], %s120
          %s122 = smul.u32 2, %s17
          %s123 = ssub.s32 3, %s122
          %p124 = scmp.lt.s32.totalorder %s123, 2
          %s125 = scalar_select %p124, %s123, 2
          %s126 = smul.u32 128, %s125
          %s128 = ssub.s32 256, %s126
          %129 = vsyncadd %s118, %s128
          %p130 = scmp.ne.s32.totalorder 0, %s126
          %s131 = smul.addr %s122, 128
          %s132 = scalar_lea.hbm %s0, %s131
          %s133 = smul.u32 8, %s125
          %s134 = sshll.u32 %s121, 4
          %s135 = int_to_ptr.vmem [resolvable:$true] %s134
          %s136 = sshll.u32 %s133, 4
          %140 = dma.hbm_to_vmem [thread:$0]  (%p130), %s132, %s136, %s135, %s118, 128, 128, 8
        $region20: #{tpu_custom_call.1} parent=15 // pred_fallthru
          _
        // Predicated region
        $region21: #{tpu_custom_call.1} parent=15 // pred_check
          %p141 = pneg %p63
        $region22: #{tpu_custom_call.1} parent=15 // pred_check_branch
          %143 = sbr.rel (%p141) target = $region24
        $region23: #{tpu_custom_call.1} parent=15 // pred_region
          %s144 = sand.u32 %s53, 1
          %s145 = scalar_lea.sflag [#allocation6], %s144
          %s146 = sand.u32 %s53, 1
          %s147 = smul.addr %s146, 128
          %s148 = scalar_lea.vmem [#allocation5], %s147
          %s149 = smul.u32 16, %s17
          %s150 = ssub.s32 18, %s149
          %p151 = scmp.lt.s32.totalorder %s150, 16
          %s152 = scalar_select %p151, %s150, 16
          %s153 = smul.u32 128, %s152
          %s155 = ssub.s32 2048, %s153
          %156 = vsyncadd %s145, %s155
          %p157 = scmp.ne.s32.totalorder 0, %s153
          %s158 = smul.addr %s149, 128
          %s159 = scalar_lea.hbm %s1, %s158
          %s160 = smul.u32 8, %s152
          %s161 = sshll.u32 %s148, 4
          %s162 = int_to_ptr.vmem [resolvable:$true] %s161
          %s163 = sshll.u32 %s160, 4
          %167 = dma.hbm_to_vmem [thread:$0]  (%p157), %s159, %s163, %s162, %s145, 128, 128, 8
        $region24: #{tpu_custom_call.1} parent=15 // pred_fallthru
          _
      $region16: #{tpu_custom_call.1} parent=5 // pred_fallthru
        _
      %p168 = scmp.le.s32.totalorder 1, %s17
      %p169 = scmp.lt.s32.totalorder %s17, 3
      %p170 = pnand %p168, %p169
      %p171 = pneg %p170
      // Predicated region
      $region25: #{tpu_custom_call.1} parent=5 // pred_check
        _
      $region26: #{tpu_custom_call.1} parent=5 // pred_check_branch
        %173 = sbr.rel (%p170) target = $region28
      $region27: #{tpu_custom_call.1} parent=5 // pred_region
        %s174 = ssub.s32 %s17, 1
        %s175 = sand.u32 %s30, 1
        %s176 = scalar_lea.sflag [#allocation3], %s175
        %s177 = sand.u32 %s30, 1
        %s178 = smul.addr %s177, 16
        %s179 = scalar_lea.vmem [#allocation2], %s178
        // Predicated region
        $region29: #{tpu_custom_call.1} parent=27 // pred_check
          %p180 = pneg %p43
        $region30: #{tpu_custom_call.1} parent=27 // pred_check_branch
          %182 = sbr.rel (%p180) target = $region32
        $region31: #{tpu_custom_call.1} parent=27 // pred_region
          %183 = dma.done %s176, 256
        $region32: #{tpu_custom_call.1} parent=27 // pred_fallthru
          _
        %s184 = sand.u32 %s56, 1
        %s185 = scalar_lea.sflag [#allocation6], %s184
        %s186 = sand.u32 %s56, 1
        %s187 = smul.addr %s186, 128
        %s188 = scalar_lea.vmem [#allocation5], %s187
        // Predicated region
        $region33: #{tpu_custom_call.1} parent=27 // pred_check
          %p189 = pneg %p69
        $region34: #{tpu_custom_call.1} parent=27 // pred_check_branch
          %191 = sbr.rel (%p189) target = $region36
        $region35: #{tpu_custom_call.1} parent=27 // pred_region
          %192 = dma.done %s185, 2048
        $region36: #{tpu_custom_call.1} parent=27 // pred_fallthru
          _
        %s193 = sand.u32 %s30, 1
        %s194 = scalar_lea.sflag [#allocation3], %s193
        %s195 = sand.u32 %s30, 1
        %s196 = smul.addr %s195, 16
        %s197 = scalar_lea.vmem [#allocation2], %s196
        %p198 = pneg %p43
        %p199 = pneg %p40
        %s200 = sand.u32 %s56, 1
        %s201 = scalar_lea.sflag [#allocation6], %s200
        %s202 = sand.u32 %s56, 1
        %s203 = smul.addr %s202, 128
        %s204 = scalar_lea.vmem [#allocation5], %s203
        %p205 = pneg %p69
        %p206 = pneg %p66
        %p207 = pneg %p95
        %p208 = pneg %p92
        %s209 = sand.u32 %s82, 1
        %s210 = scalar_lea.sflag [#allocation4], %s209
        %s211 = sand.u32 %s82, 1
        %s212 = smul.addr %s211, 16
        %s213 = scalar_lea.vmem [#allocation7], %s212
        %s214 = smul.u32 2, %s22
        %s215 = ssub.s32 3, %s214
        %p216 = scmp.lt.s32.totalorder %s215, 2
        %s217 = scalar_select %p216, %s215, 2
        %s218 = smul.u32 128, %s217
        %s219 = smul.u32 16, %s22
        %s220 = ssub.s32 18, %s219
        %p221 = scmp.lt.s32.totalorder %s220, 16
        %s222 = scalar_select %p221, %s220, 16
        %s223 = smul.u32 128, %s222
        %s224 = smul.u32 2, %s22
        %s225 = ssub.s32 3, %s224
        %p226 = scmp.lt.s32.totalorder %s225, 2
        %s227 = scalar_select %p226, %s225, 2
        %s228 = smul.u32 128, %s227
        %v229 = vld [vmem:[%s188] sm:$0xff]
        %v230 = vld [vmem:[%s188 + $0x8] sm:$0xff]
        %v231 = vld [vmem:[%s188 + $0x10] sm:$0xff]
        %v232 = vld [vmem:[%s188 + $0x18] sm:$0xff]
        %v233 = vld [vmem:[%s188 + $0x20] sm:$0xff]
        %v234 = vld [vmem:[%s188 + $0x28] sm:$0xff]
        %v235 = vld [vmem:[%s188 + $0x30] sm:$0xff]
        %v236 = vld [vmem:[%s188 + $0x38] sm:$0xff]
        %v237 = vld [vmem:[%s188 + $0x40] sm:$0xff]
        %v238 = vld [vmem:[%s188 + $0x48] sm:$0xff]
        %v239 = vld [vmem:[%s188 + $0x50] sm:$0xff]
        %v240 = vld [vmem:[%s188 + $0x58] sm:$0xff]
        %v241 = vld [vmem:[%s188 + $0x60] sm:$0xff]
        %v242 = vld [vmem:[%s188 + $0x68] sm:$0xff]
        %v243 = vld [vmem:[%s188 + $0x70] sm:$0xff]
        %v244 = vld [vmem:[%s188 + $0x78] sm:$0xff]
        %vm245 = vcmask 785408
        %v246 = vsel %vm245, %v229, 0.0
        %v247 = vrot.slane %v246, 4
        %v248 = vadd.f32 %v246, %v247
        %v249 = vrot.slane %v248, 2
        %v250 = vadd.f32 %v248, %v249
        %v251 = vrot.slane %v250, 1
        %v252 = vadd.f32 %v250, %v251
        %v253 = vsel %vm245, %v230, 0.0
        %v254 = vrot.slane %v253, 4
        %v255 = vadd.f32 %v253, %v254
        %v256 = vrot.slane %v255, 2
        %v257 = vadd.f32 %v255, %v256
        %v258 = vrot.slane %v257, 1
        %v259 = vadd.f32 %v257, %v258
        %v260 = vsel %vm245, %v231, 0.0
        %v261 = vrot.slane %v260, 4
        %v262 = vadd.f32 %v260, %v261
        %v263 = vrot.slane %v262, 2
        %v264 = vadd.f32 %v262, %v263
        %v265 = vrot.slane %v264, 1
        %v266 = vadd.f32 %v264, %v265
        %v267 = vsel %vm245, %v232, 0.0
        %v268 = vrot.slane %v267, 4
        %v269 = vadd.f32 %v267, %v268
        %v270 = vrot.slane %v269, 2
        %v271 = vadd.f32 %v269, %v270
        %v272 = vrot.slane %v271, 1
        %v273 = vadd.f32 %v271, %v272
        %v274 = vsel %vm245, %v233, 0.0
        %v275 = vrot.slane %v274, 4
        %v276 = vadd.f32 %v274, %v275
        %v277 = vrot.slane %v276, 2
        %v278 = vadd.f32 %v276, %v277
        %v279 = vrot.slane %v278, 1
        %v280 = vadd.f32 %v278, %v279
        %v281 = vsel %vm245, %v234, 0.0
        %v282 = vrot.slane %v281, 4
        %v283 = vadd.f32 %v281, %v282
        %v284 = vrot.slane %v283, 2
        %v285 = vadd.f32 %v283, %v284
        %v286 = vrot.slane %v285, 1
        %v287 = vadd.f32 %v285, %v286
        %v288 = vsel %vm245, %v235, 0.0
        %v289 = vrot.slane %v288, 4
        %v290 = vadd.f32 %v288, %v289
        %v291 = vrot.slane %v290, 2
        %v292 = vadd.f32 %v290, %v291
        %v293 = vrot.slane %v292, 1
        %v294 = vadd.f32 %v292, %v293
        %v295 = vsel %vm245, %v236, 0.0
        %v296 = vrot.slane %v295, 4
        %v297 = vadd.f32 %v295, %v296
        %v298 = vrot.slane %v297, 2
        %v299 = vadd.f32 %v297, %v298
        %v300 = vrot.slane %v299, 1
        %v301 = vadd.f32 %v299, %v300
        %v302 = vsel %vm245, %v237, 0.0
        %v303 = vrot.slane %v302, 4
        %v304 = vadd.f32 %v302, %v303
        %v305 = vrot.slane %v304, 2
        %v306 = vadd.f32 %v304, %v305
        %v307 = vrot.slane %v306, 1
        %v308 = vadd.f32 %v306, %v307
        %v309 = vsel %vm245, %v238, 0.0
        %v310 = vrot.slane %v309, 4
        %v311 = vadd.f32 %v309, %v310
        %v312 = vrot.slane %v311, 2
        %v313 = vadd.f32 %v311, %v312
        %v314 = vrot.slane %v313, 1
        %v315 = vadd.f32 %v313, %v314
        %v316 = vsel %vm245, %v239, 0.0
        %v317 = vrot.slane %v316, 4
        %v318 = vadd.f32 %v316, %v317
        %v319 = vrot.slane %v318, 2
        %v320 = vadd.f32 %v318, %v319
        %v321 = vrot.slane %v320, 1
        %v322 = vadd.f32 %v320, %v321
        %v323 = vsel %vm245, %v240, 0.0
        %v324 = vrot.slane %v323, 4
        %v325 = vadd.f32 %v323, %v324
        %v326 = vrot.slane %v325, 2
        %v327 = vadd.f32 %v325, %v326
        %v328 = vrot.slane %v327, 1
        %v329 = vadd.f32 %v327, %v328
        %v330 = vsel %vm245, %v241, 0.0
        %v331 = vrot.slane %v330, 4
        %v332 = vadd.f32 %v330, %v331
        %v333 = vrot.slane %v332, 2
        %v334 = vadd.f32 %v332, %v333
        %v335 = vrot.slane %v334, 1
        %v336 = vadd.f32 %v334, %v335
        %v337 = vsel %vm245, %v242, 0.0
        %v338 = vrot.slane %v337, 4
        %v339 = vadd.f32 %v337, %v338
        %v340 = vrot.slane %v339, 2
        %v341 = vadd.f32 %v339, %v340
        %v342 = vrot.slane %v341, 1
        %v343 = vadd.f32 %v341, %v342
        %v344 = vsel %vm245, %v243, 0.0
        %v345 = vrot.slane %v344, 4
        %v346 = vadd.f32 %v344, %v345
        %v347 = vrot.slane %v346, 2
        %v348 = vadd.f32 %v346, %v347
        %v349 = vrot.slane %v348, 1
        %v350 = vadd.f32 %v348, %v349
        %v351 = vsel %vm245, %v244, 0.0
        %v352 = vrot.slane %v351, 4
        %v353 = vadd.f32 %v351, %v352
        %v354 = vrot.slane %v353, 2
        %v355 = vadd.f32 %v353, %v354
        %v356 = vrot.slane %v355, 1
        %v357 = vadd.f32 %v355, %v356
        %v358 = vld [vmem:[%s179] sm:$0xff]
        %v359 = vld [vmem:[%s179 + $0x8] sm:$0xff]
        %v362 = vrot.slane %v358, 1
        %v363 = vrot.slane %v358, 2
        %v364 = vrot.slane %v358, 3
        %v365 = vrot.slane %v358, 4
        %v366 = vrot.slane %v358, 5
        %v367 = vrot.slane %v358, 6
        %v368 = vrot.slane %v358, 7
        %v369 = vrot.slane %v359, 1
        %v370 = vrot.slane %v359, 2
        %v371 = vrot.slane %v359, 3
        %v372 = vrot.slane %v359, 4
        %v373 = vrot.slane %v359, 5
        %v374 = vrot.slane %v359, 6
        %v375 = vrot.slane %v359, 7
        %v392 = vmul.f32 %v252, %v358
        %v393 = vmul.f32 %v259, %v362
        %v394 = vmul.f32 %v266, %v363
        %v395 = vmul.f32 %v273, %v364
        %v396 = vmul.f32 %v280, %v365
        %v397 = vmul.f32 %v287, %v366
        %v398 = vmul.f32 %v294, %v367
        %v399 = vmul.f32 %v301, %v368
        %v400 = vmul.f32 %v308, %v359
        %v401 = vmul.f32 %v315, %v369
        %v402 = vmul.f32 %v322, %v370
        %v403 = vmul.f32 %v329, %v371
        %v404 = vmul.f32 %v336, %v372
        %v405 = vmul.f32 %v343, %v373
        %v406 = vmul.f32 %v350, %v374
        %v407 = vmul.f32 %v357, %v375
        %v424 = vrot.slane %v393, 7
        %vm425 = vcmask 1041409
        %v426 = vsel %vm425, %v424, %v392
        %v427 = vrot.slane %v394, 6
        %vm428 = vcmask 1042434
        %v429 = vsel %vm428, %v427, %v426
        %v430 = vrot.slane %v395, 5
        %vm431 = vcmask 1043459
        %v432 = vsel %vm431, %v430, %v429
        %v433 = vrot.slane %v396, 4
        %vm434 = vcmask 1044484
        %v435 = vsel %vm434, %v433, %v432
        %v436 = vrot.slane %v397, 3
        %vm437 = vcmask 1045509
        %v438 = vsel %vm437, %v436, %v435
        %v439 = vrot.slane %v398, 2
        %vm440 = vcmask 1046534
        %v441 = vsel %vm440, %v439, %v438
        %v442 = vrot.slane %v399, 1
        %vm443 = vcmask 1047559
        %v444 = vsel %vm443, %v442, %v441
        %v445 = vrot.slane %v401, 7
        %v446 = vsel %vm425, %v445, %v400
        %v447 = vrot.slane %v402, 6
        %v448 = vsel %vm428, %v447, %v446
        %v449 = vrot.slane %v403, 5
        %v450 = vsel %vm431, %v449, %v448
        %v451 = vrot.slane %v404, 4
        %v452 = vsel %vm434, %v451, %v450
        %v453 = vrot.slane %v405, 3
        %v454 = vsel %vm437, %v453, %v452
        %v455 = vrot.slane %v406, 2
        %v456 = vsel %vm440, %v455, %v454
        %v457 = vrot.slane %v407, 1
        %v458 = vsel %vm443, %v457, %v456
        %461 = vst.msk [vmem:[%s213] sm:$0xff] %vm245, %v444
        %462 = vst.msk [vmem:[%s213 + $0x8] sm:$0xff] %vm245, %v458
        %s463 = sand.u32 %s82, 1
        %s464 = scalar_lea.sflag [#allocation4], %s463
        %s465 = sand.u32 %s82, 1
        %s466 = smul.addr %s465, 16
        %s467 = scalar_lea.vmem [#allocation7], %s466
        // Predicated region
        $region37: #{tpu_custom_call.1} parent=27 // pred_check
          %p468 = pneg %p92
        $region38: #{tpu_custom_call.1} parent=27 // pred_check_branch
          %470 = sbr.rel (%p468) target = $region40
        $region39: #{tpu_custom_call.1} parent=27 // pred_region
          %s471 = smul.u32 2, %s22
          %s472 = ssub.s32 3, %s471
          %p473 = scmp.lt.s32.totalorder %s472, 2
          %s474 = scalar_select %p473, %s472, 2
          %s475 = smul.u32 128, %s474
          %s477 = ssub.s32 256, %s475
          %478 = vsyncadd %s464, %s477
          %p479 = scmp.ne.s32.totalorder 0, %s475
          %s480 = smul.addr %s471, 128
          %s481 = scalar_lea.hbm %s2, %s480
          %s482 = smul.u32 8, %s474
          %s483 = sshll.u32 %s467, 4
          %s484 = int_to_ptr.vmem [resolvable:$true] %s483
          %s485 = sshll.u32 %s482, 4
          %489 = dma.vmem_to_hbm [thread:$0]  (%p479), %s484, %s485, %s481, %s464, 128, 128, 8
        $region40: #{tpu_custom_call.1} parent=27 // pred_fallthru
          _
      $region28: #{tpu_custom_call.1} parent=5 // pred_fallthru
        _
      %p490 = scmp.le.s32.totalorder 2, %s17
      // Predicated region
      $region41: #{tpu_custom_call.1} parent=5 // pred_check
        %p491 = pneg %p490
      $region42: #{tpu_custom_call.1} parent=5 // pred_check_branch
        %493 = sbr.rel (%p491) target = $region44
      $region43: #{tpu_custom_call.1} parent=5 // pred_region
        %s494 = ssub.s32 %s17, 2
        // Predicated region
        $region45: #{tpu_custom_call.1} parent=43 // pred_check
          %p495 = pneg %p98
        $region46: #{tpu_custom_call.1} parent=43 // pred_check_branch
          %497 = sbr.rel (%p495) target = $region48
        $region47: #{tpu_custom_call.1} parent=43 // pred_region
          %s498 = sand.u32 %s83, 1
          %s499 = scalar_lea.sflag [#allocation4], %s498
          %s500 = sand.u32 %s83, 1
          %s501 = smul.addr %s500, 16
          %s502 = scalar_lea.vmem [#allocation7], %s501
          %503 = dma.done %s499, 256
        $region48: #{tpu_custom_call.1} parent=43 // pred_fallthru
          _
      $region44: #{tpu_custom_call.1} parent=5 // pred_fallthru
        _
    $region6: #{tpu_custom_call.1} parent=1 // loop_footer
      %s21 = sadd.s32 1, %s17
    $region7: #{tpu_custom_call.1} parent=1 // loop_footer_branch
      %16 = sbr.rel target = $region3
    $region8: #{tpu_custom_call.1} parent=1 // loop_exit
      _
    %504 = vsyncpa [#allocation3], 1
    %s505 = scalar_lea.sflag [#allocation3], 1
    %506 = vsyncpa %s505, 1
    %507 = vsyncpa [#allocation6], 1
    %s508 = scalar_lea.sflag [#allocation6], 1
    %509 = vsyncpa %s508, 1
    %510 = vsyncpa [#allocation4], 1
    %s511 = scalar_lea.sflag [#allocation4], 1
    %512 = vsyncpa %s511, 1

</llo_original>
